<compile_context>
chip_gen: v6e
topology: v6e:2x2x1
jax: 0.10.0
libtpu: 0.0.40
codegen_flags: <defaults>
</compile_context>

<pallas_src>
import jax
import jax.numpy as jnp
from jax.experimental import pallas as pl
from jax.experimental.pallas import tpu as pltpu

_LANE = 128
_SUBLANE = 8
# Per-tensor element-count ceiling for the fused VMEM-resident path (conservative:
# ~2 MiB f32 per input keeps inputs + f32 temporaries well under the default scoped VMEM
# on every generation, including v7x's smaller 64 MiB physical VMEM).
_FUSED_MAX_ELEMS = 512 * 1024


def _stable_softplus(x):
    # Matches PyTorch's BCEWithLogits stabilization: softplus(x) = max(x,0) + log1p(exp(-|x|))
    return jnp.maximum(x, 0.0) + jnp.log1p(jnp.exp(-jnp.abs(x)))


def _round_up(x, m):
    return ((x + m - 1) // m) * m


def _elem_mask(rows, n):
    """(rows,128) bool mask: flattened element index < n (n is a static Python int)."""
    eidx = (jax.lax.broadcasted_iota(jnp.int32, (rows, _LANE), 0) * _LANE
            + jax.lax.broadcasted_iota(jnp.int32, (rows, _LANE), 1))
    return eidx < n


def _sum_all_keepdims(x):
    """(R,128) -> (1,1) via two single-axis keepdims reductions (lane then sublane)."""
    return jnp.sum(jnp.sum(x, axis=1, keepdims=True), axis=0, keepdims=True)


def _as_lane_rows(x):
    """Free flatten + lane-dense (rows,128) view; zero-pads the tail only when
    size % 128 != 0 (pad elements are masked out in-kernel)."""
    flat = x.reshape(-1)
    n = flat.shape[0]
    rows = pl.cdiv(n, _LANE)
    pad = rows * _LANE - n
    if pad:
        flat = jnp.pad(flat, (0, pad))
    return flat.reshape(rows, _LANE)


def _default_stripes():
    # 2 TensorCores per chip on v4/v5p megacore and v7x; single TC on v5e/v6e.
    try:
        kind = jax.devices()[0].device_kind.lower()
    except Exception:
        return 1
    return 2 if any(t in kind for t in ("v7", "v5p", "v4")) else 1


# ---------------------------------------------------------------------------
# Fused VMEM-resident path (small score maps): means + softplus sums in one call.
# ---------------------------------------------------------------------------
def _make_fused_kernel(n_real, n_fake, rows_real, rows_fake):
    inv_nr = 1.0 / float(n_real)
    inv_nf = 1.0 / float(n_fake)
    need_mask_real = rows_real * _LANE != n_real
    need_mask_fake = rows_fake * _LANE != n_fake

    def kernel(real_ref, fake_ref, sum_real_ref, sum_fake_ref):
        real = real_ref[...].astype(jnp.float32)   # (rows_real, 128) resident
        fake = fake_ref[...].astype(jnp.float32)   # (rows_fake, 128) resident

        # Zero-padded tails (if any) keep the sums exact; divide by the true counts.
        mean_real = _sum_all_keepdims(real) * inv_nr   # (1,1)
        mean_fake = _sum_all_keepdims(fake) * inv_nf   # (1,1)

        # BCEWithLogits(x, 1) = softplus(-x), x = real - mean_fake
        sp_real = _stable_softplus(mean_fake - real)
        # BCEWithLogits(x, 0) = softplus(x),  x = fake - mean_real
        sp_fake = _stable_softplus(fake - mean_real)

        if need_mask_real:
            sp_real = jnp.where(_elem_mask(rows_real, n_real), sp_real, 0.0)
        if need_mask_fake:
            sp_fake = jnp.where(_elem_mask(rows_fake, n_fake), sp_fake, 0.0)

        # Lane-dense (1,128) partial sums; tiny final cross-lane reduce in the wrapper.
        sum_real_ref[...] = jnp.sum(sp_real, axis=0, keepdims=True)
        sum_fake_ref[...] = jnp.sum(sp_fake, axis=0, keepdims=True)

    return kernel


# ---------------------------------------------------------------------------
# Streaming path (large tensors): means precomputed, tiles streamed via BlockSpec.
# ---------------------------------------------------------------------------
def _make_streaming_kernel(tm, n_real, n_fake, tiles_per_stripe):
    def kernel(means_ref, real_ref, fake_ref, sum_real_ref, sum_fake_ref):
        # Grid: (stripe [parallel], tile [arbitrary / reduction]).
        i = pl.program_id(1)

        @pl.when(i == 0)
        def _init():
            sum_real_ref[...] = jnp.zeros_like(sum_real_ref)
            sum_fake_ref[...] = jnp.zeros_like(sum_fake_ref)

        mean_fake = means_ref[0]
        mean_real = means_ref[1]

        # Logical tile index and global element indices for masking (counts are static).
        tile = pl.program_id(0) * tiles_per_stripe + i
        base = tile * (tm * _LANE)
        eidx = base + (jax.lax.broadcasted_iota(jnp.int32, (tm, _LANE), 0) * _LANE
                       + jax.lax.broadcasted_iota(jnp.int32, (tm, _LANE), 1))

        real = real_ref[...].astype(jnp.float32)   # (tm, 128)
        fake = fake_ref[...].astype(jnp.float32)   # (tm, 128)

        sp_real = jnp.where(eidx < n_real, _stable_softplus(mean_fake - real), 0.0)
        sp_fake = jnp.where(eidx < n_fake, _stable_softplus(fake - mean_real), 0.0)

        # Fold into the resident (1,8,128) accumulator block with pure VPU adds.
        sum_real_ref[...] += jnp.sum(
            sp_real.reshape(tm // _SUBLANE, _SUBLANE, _LANE), axis=0)[None]
        sum_fake_ref[...] += jnp.sum(
            sp_fake.reshape(tm // _SUBLANE, _SUBLANE, _LANE), axis=0)[None]

    return kernel


def relativistic_discriminator_loss(real_scores, fake_scores, *,
                                    block_rows=1024, stripes=None, use_fused=None):
    """Relativistic discriminator loss. Scores may be any shape, f32 or bf16 dtype.

    block_rows: rows (of 128 lanes) per streamed tile; 1024 amortizes per-step overhead
                (2 inputs x 2 pipeline buffers = 2 MiB f32, far under scoped VMEM).
    stripes:    outer "parallel" grid axis; auto: 2 only on 2-TensorCore parts.
    use_fused:  force/skip the fully-fused VMEM-resident path (auto by size).
    """
    n_real = int(real_scores.size)
    n_fake = int(fake_scores.size)

    if stripes is None:
        stripes = _default_stripes()
    if use_fused is None:
        use_fused = max(n_real, n_fake) <= _FUSED_MAX_ELEMS

    real2d = _as_lane_rows(real_scores)
    fake2d = _as_lane_rows(fake_scores)
    rows_real, rows_fake = real2d.shape[0], fake2d.shape[0]

    in_bytes = (real2d.size * real2d.dtype.itemsize
                + fake2d.size * fake2d.dtype.itemsize)
    elems = n_real + n_fake

    if use_fused:
        # --- single fused pallas_call: means + masked softplus sums in-kernel ---
        cost = pl.CostEstimate(flops=14 * elems, transcendentals=2 * elems,
                               bytes_accessed=in_bytes + 2 * _LANE * 4)
        sum_real, sum_fake = pl.pallas_call(
            _make_fused_kernel(n_real, n_fake, rows_real, rows_fake),
            out_shape=(jax.ShapeDtypeStruct((1, _LANE), jnp.float32),
                       jax.ShapeDtypeStruct((1, _LANE), jnp.float32)),
            in_specs=[pl.BlockSpec(memory_space=pltpu.VMEM),
                      pl.BlockSpec(memory_space=pltpu.VMEM)],
            out_specs=(pl.BlockSpec(memory_space=pltpu.VMEM),
                       pl.BlockSpec(memory_space=pltpu.VMEM)),
            cost_estimate=cost,
        )(real2d, fake2d)
    else:
        # --- streaming path: mean pre-pass hoisted, tiles streamed over both tensors ---
        mean_real = jnp.mean(real_scores.astype(jnp.float32))
        mean_fake = jnp.mean(fake_scores.astype(jnp.float32))
        means = jnp.stack([mean_fake, mean_real]).astype(jnp.float32)   # (2,) -> SMEM

        max_rows = max(rows_real, rows_fake)
        tm = _round_up(min(block_rows, _round_up(max_rows, _SUBLANE)), _SUBLANE)
        tiles_real = pl.cdiv(rows_real, tm)
        tiles_fake = pl.cdiv(rows_fake, tm)
        total_tiles = max(tiles_real, tiles_fake)
        stripes = max(1, min(stripes, total_tiles))
        tiles_per_stripe = pl.cdiv(total_tiles, stripes)

        # Clamped index maps: once a tensor is exhausted the block index stops changing
        # (no further DMA) and the in-kernel element mask zeroes its contribution.
        def real_map(c, i):
            return (jnp.minimum(c * tiles_per_stripe + i, tiles_real - 1), 0)

        def fake_map(c, i):
            return (jnp.minimum(c * tiles_per_stripe + i, tiles_fake - 1), 0)

        cost = pl.CostEstimate(
            flops=14 * elems, transcendentals=2 * elems,
            bytes_accessed=in_bytes + 2 * stripes * _SUBLANE * _LANE * 4)

        acc_shape = jax.ShapeDtypeStruct((stripes, _SUBLANE, _LANE), jnp.float32)
        sum_real, sum_fake = pl.pallas_call(
            _make_streaming_kernel(tm, n_real, n_fake, tiles_per_stripe),
            out_shape=(acc_shape, acc_shape),
            grid=(stripes, tiles_per_stripe),
            in_specs=[
                pl.BlockSpec(memory_space=pltpu.SMEM),            # (2,) means
                pl.BlockSpec((tm, _LANE), real_map),
                pl.BlockSpec((tm, _LANE), fake_map),
            ],
            out_specs=(
                pl.BlockSpec((1, _SUBLANE, _LANE), lambda c, i: (c, 0, 0)),
                pl.BlockSpec((1, _SUBLANE, _LANE), lambda c, i: (c, 0, 0)),
            ),
            compiler_params=pltpu.CompilerParams(
                dimension_semantics=("parallel", "arbitrary"),
            ),
            cost_estimate=cost,
        )(means, real2d, fake2d)

    # Tiny final cross-lane reduce + normalization (true element counts) in XLA.
    loss_real = jnp.sum(sum_real) / jnp.float32(n_real)
    loss_fake = jnp.sum(sum_fake) / jnp.float32(n_fake)
    return 0.5 * (loss_real + loss_fake)


def _reference_loss(real_scores, fake_scores):
    # Pure-JAX mirror of the PyTorch forward.
    r = real_scores.astype(jnp.float32)
    f = fake_scores.astype(jnp.float32)
    x_real = r - jnp.mean(f)
    x_fake = f - jnp.mean(r)
    loss_real = jnp.mean(jax.nn.softplus(-x_real))
    loss_fake = jnp.mean(jax.nn.softplus(x_fake))
    return 0.5 * (loss_real + loss_fake)


if __name__ == "__main__":
    key = jax.random.PRNGKey(0)
    k1, k2, k3, k4, k5, k6 = jax.random.split(key, 6)

    # 1) PatchGAN-style aligned score maps -> fused VMEM-resident path.
    real = jax.random.normal(k1, (4, 1, 64, 64), dtype=jnp.float32)
    fake = jax.random.normal(k2, (4, 1, 64, 64), dtype=jnp.float32) * 0.5 - 0.3
    ref = _reference_loss(real, fake)
    out = jax.block_until_ready(relativistic_discriminator_loss(real, fake))
    assert jnp.allclose(out, ref, atol=1e-5, rtol=1e-5), (out, ref)

    # 2) Same inputs through the streaming path: multi-tile grid + 2 stripes.
    out2 = jax.block_until_ready(relativistic_discriminator_loss(
        real, fake, use_fused=False, block_rows=32, stripes=2))
    assert jnp.allclose(out2, ref, atol=1e-5, rtol=1e-5), (out2, ref)

    # 3) Ragged, unequal sizes: exercises element masks + clamped index maps.
    real3 = jax.random.normal(k3, (3, 1, 30, 30), dtype=jnp.float32)
    fake3 = jax.random.normal(k4, (2, 1, 30, 30), dtype=jnp.float32) * 0.7 + 0.1
    ref3 = _reference_loss(real3, fake3)
    out3a = jax.block_until_ready(relativistic_discriminator_loss(real3, fake3))
    out3b = jax.block_until_ready(relativistic_discriminator_loss(
        real3, fake3, use_fused=False, block_rows=8, stripes=2))
    assert jnp.allclose(out3a, ref3, atol=1e-5, rtol=1e-5), (out3a, ref3)
    assert jnp.allclose(out3b, ref3, atol=1e-5, rtol=1e-5), (out3b, ref3)

    # 4) bf16 scores (halves HBM bytes); compute stays f32 in-kernel. Both paths.
    real4 = jax.random.normal(k5, (2, 1, 32, 32), dtype=jnp.bfloat16)
    fake4 = jax.random.normal(k6, (2, 1, 32, 32), dtype=jnp.bfloat16) * 0.5
    ref4 = _reference_loss(real4, fake4)
    out4 = jax.block_until_ready(relativistic_discriminator_loss(real4, fake4))
    out4s = jax.block_until_ready(relativistic_discriminator_loss(
        real4, fake4, use_fused=False, block_rows=8))
    assert jnp.allclose(out4, ref4, atol=1e-4, rtol=1e-4), (out4, ref4)
    assert jnp.allclose(out4s, ref4, atol=1e-4, rtol=1e-4), (out4s, ref4)

    print("KERNEL_OK")
</pallas_src>

<mosaic_0001>
module attributes {stable_mosaic.version = 11 : i64} {
  func.func @kernel(%arg0: memref<128x128xf32, #tpu.memory_space<vmem>>, %arg1: memref<128x128xf32, #tpu.memory_space<vmem>>, %arg2: memref<1x128xf32, #tpu.memory_space<vmem>>, %arg3: memref<1x128xf32, #tpu.memory_space<vmem>>) attributes {dimension_semantics = [], scalar_prefetch = 0 : i64, scratch_operands = 0 : i64, tpu.core_type = #tpu.core_type<tc>} {
    %c0 = arith.constant 0 : index
    %c0_0 = arith.constant 0 : index
    %0 = vector.load %arg0[%c0, %c0_0] : memref<128x128xf32, #tpu.memory_space<vmem>>, vector<128x128xf32>
    %c0_1 = arith.constant 0 : index
    %c0_2 = arith.constant 0 : index
    %1 = vector.load %arg1[%c0_1, %c0_2] : memref<128x128xf32, #tpu.memory_space<vmem>>, vector<128x128xf32>
    %cst = arith.constant dense<0.000000e+00> : vector<128xf32>
    %2 = vector.multi_reduction <add>, %0, %cst [1] : vector<128x128xf32> to vector<128xf32>
    %3 = vector.shape_cast %2 : vector<128xf32> to vector<128x1xf32>
    %cst_3 = arith.constant dense<0.000000e+00> : vector<1xf32>
    %4 = vector.multi_reduction <add>, %3, %cst_3 [0] : vector<128x1xf32> to vector<1xf32>
    %5 = vector.shape_cast %4 : vector<1xf32> to vector<1x1xf32>
    %cst_4 = arith.constant 6.10351563E-5 : f32
    %6 = vector.broadcast %cst_4 : f32 to vector<1x1xf32>
    %7 = arith.mulf %5, %6 : vector<1x1xf32>
    %cst_5 = arith.constant dense<0.000000e+00> : vector<128xf32>
    %8 = vector.multi_reduction <add>, %1, %cst_5 [1] : vector<128x128xf32> to vector<128xf32>
    %9 = vector.shape_cast %8 : vector<128xf32> to vector<128x1xf32>
    %cst_6 = arith.constant dense<0.000000e+00> : vector<1xf32>
    %10 = vector.multi_reduction <add>, %9, %cst_6 [0] : vector<128x1xf32> to vector<1xf32>
    %11 = vector.shape_cast %10 : vector<1xf32> to vector<1x1xf32>
    %cst_7 = arith.constant 6.10351563E-5 : f32
    %12 = vector.broadcast %cst_7 : f32 to vector<1x1xf32>
    %13 = arith.mulf %11, %12 : vector<1x1xf32>
    %14 = vector.broadcast %13 : vector<1x1xf32> to vector<128x128xf32>
    %15 = arith.subf %14, %0 : vector<128x128xf32>
    %cst_8 = arith.constant 0.000000e+00 : f32
    %16 = vector.broadcast %cst_8 : f32 to vector<128x128xf32>
    %17 = arith.maximumf %15, %16 : vector<128x128xf32>
    %18 = math.absf %15 : vector<128x128xf32>
    %cst_9 = arith.constant 0.000000e+00 : f32
    %19 = vector.broadcast %cst_9 : f32 to vector<128x128xf32>
    %20 = arith.subf %19, %18 : vector<128x128xf32>
    %21 = math.exp %20 : vector<128x128xf32>
    %22 = math.log1p %21 : vector<128x128xf32>
    %23 = arith.addf %17, %22 : vector<128x128xf32>
    %24 = vector.broadcast %7 : vector<1x1xf32> to vector<128x128xf32>
    %25 = arith.subf %1, %24 : vector<128x128xf32>
    %cst_10 = arith.constant 0.000000e+00 : f32
    %26 = vector.broadcast %cst_10 : f32 to vector<128x128xf32>
    %27 = arith.maximumf %25, %26 : vector<128x128xf32>
    %28 = math.absf %25 : vector<128x128xf32>
    %cst_11 = arith.constant 0.000000e+00 : f32
    %29 = vector.broadcast %cst_11 : f32 to vector<128x128xf32>
    %30 = arith.subf %29, %28 : vector<128x128xf32>
    %31 = math.exp %30 : vector<128x128xf32>
    %32 = math.log1p %31 : vector<128x128xf32>
    %33 = arith.addf %27, %32 : vector<128x128xf32>
    %cst_12 = arith.constant dense<0.000000e+00> : vector<128xf32>
    %34 = vector.multi_reduction <add>, %23, %cst_12 [0] : vector<128x128xf32> to vector<128xf32>
    %35 = vector.shape_cast %34 : vector<128xf32> to vector<1x128xf32>
    %c0_13 = arith.constant 0 : index
    %c0_14 = arith.constant 0 : index
    %36 = vector.load %arg2[%c0_13, %c0_14] : memref<1x128xf32, #tpu.memory_space<vmem>>, vector<1x128xf32>
    tpu.vector_store %arg2[%c0_13, %c0_14], %35 {strides = array<i32>} : memref<1x128xf32, #tpu.memory_space<vmem>>, vector<1x128xf32>,
    %cst_15 = arith.constant dense<0.000000e+00> : vector<128xf32>
    %37 = vector.multi_reduction <add>, %33, %cst_15 [0] : vector<128x128xf32> to vector<128xf32>
    %38 = vector.shape_cast %37 : vector<128xf32> to vector<1x128xf32>
    %c0_16 = arith.constant 0 : index
    %c0_17 = arith.constant 0 : index
    %39 = vector.load %arg3[%c0_16, %c0_17] : memref<1x128xf32, #tpu.memory_space<vmem>>, vector<1x128xf32>
    tpu.vector_store %arg3[%c0_16, %c0_17], %38 {strides = array<i32>} : memref<1x128xf32, #tpu.memory_space<vmem>>, vector<1x128xf32>,
    return
  }
}

</mosaic_0001>

<llo_original>
// kernel: tpu_custom_call.1
$region0: #{tpu_custom_call.1}
  #allocation0 [shape = 'u32[]', space=smem, size = 0x4, offset = 0x4, fixed_abs, tag = 'smem constant byte address 0x4 - core index']
  #allocation1 [shape = 'u32[144,128]{1,0:T(1,128)}', space=vmem, size = 0x12000, scoped, tag = 'internal scratch']
  %s0 = inlined_call_operand.hbm [shape: f32[128,128], index: 0, kind: input, shape index: {}]
  %s1 = inlined_call_operand.hbm [shape: f32[128,128], index: 1, kind: input, shape index: {}]
  %s2 = inlined_call_operand.hbm [shape: f32[1,128], index: 2, kind: output, shape index: {0}]
  %s3 = inlined_call_operand.hbm [shape: f32[1,128], index: 3, kind: output, shape index: {1}]
  %4 = xla_tuple %s2, %s3
  %s5 = sld [smem:[#allocation0]]
  $region34: #{tpu_custom_call.1} parent=0
    _
  %s7 = ssub.s32 1, %s5
  %s8 = scalar_select 0, %s7, %s5
  $region1: #{tpu_custom_call.1} parent=0
    #allocation2 [shape = 'u8[65536]{0}', space=vmem, size = 0x10000, scoped, tag = 'input window, operand 0, single buffered']
    #allocation3 [shape = 's32[1]{0}', space=sflag, size = 0x4, scoped, tag = 'scoped memory for tpu_custom_call.1']
    #allocation4 [shape = 's32[1]{0}', space=sflag, size = 0x4, scoped, tag = 'scoped memory for tpu_custom_call.1']
    #allocation5 [shape = 'u8[65536]{0}', space=vmem, size = 0x10000, scoped, tag = 'input window, operand 1, single buffered']
    #allocation6 [shape = 's32[1]{0}', space=sflag, size = 0x4, scoped, tag = 'scoped memory for tpu_custom_call.1']
    #allocation7 [shape = 'u8[512]{0}', space=vmem, size = 0x400, scoped, tag = 'output window, operand 0, single buffered']
    #allocation8 [shape = 'u8[512]{0}', space=vmem, size = 0x400, scoped, tag = 'output window, operand 1, single buffered']
    #allocation9 [shape = 's32[1]{0}', space=sflag, size = 0x4, scoped, tag = 'scoped memory for tpu_custom_call.1']
    %9 = vsyncpa [#allocation3], 0
    %10 = vsyncpa [#allocation6], 0
    %11 = vsyncpa [#allocation4], 0
    %12 = vsyncpa [#allocation9], 0
    // Predicated region
    $region2: #{tpu_custom_call.1} parent=1 // pred_check
      _
    $region3: #{tpu_custom_call.1} parent=1 // pred_check_branch
      %14 = sbr.rel (0) target = $region5
    $region4: #{tpu_custom_call.1} parent=1 // pred_region
      %s16 = ssub.s32 2048, 2048
      %17 = vsyncadd [#allocation3], %s16
      %s18 = sshll.u32 [#allocation2], 4
      %s19 = int_to_ptr.vmem [resolvable:$true] %s18
      %24 = dma.hbm_to_vmem [thread:$0]  %s0, 2048, %s19, [#allocation3], 128, 128, 8
    $region5: #{tpu_custom_call.1} parent=1 // pred_fallthru
      _
    // Predicated region
    $region6: #{tpu_custom_call.1} parent=1 // pred_check
      _
    $region7: #{tpu_custom_call.1} parent=1 // pred_check_branch
      %26 = sbr.rel (0) target = $region9
    $region8: #{tpu_custom_call.1} parent=1 // pred_region
      %s28 = ssub.s32 2048, 2048
      %29 = vsyncadd [#allocation6], %s28
      %s30 = sshll.u32 [#allocation5], 4
      %s31 = int_to_ptr.vmem [resolvable:$true] %s30
      %36 = dma.hbm_to_vmem [thread:$0]  %s1, 2048, %s31, [#allocation6], 128, 128, 8
    $region9: #{tpu_custom_call.1} parent=1 // pred_fallthru
      _
    // Predicated region
    $region10: #{tpu_custom_call.1} parent=1 // pred_check
      _
    $region11: #{tpu_custom_call.1} parent=1 // pred_check_branch
      %38 = sbr.rel (0) target = $region13
    $region12: #{tpu_custom_call.1} parent=1 // pred_region
      %39 = dma.done [#allocation3], 2048
    $region13: #{tpu_custom_call.1} parent=1 // pred_fallthru
      _
    // Predicated region
    $region14: #{tpu_custom_call.1} parent=1 // pred_check
      _
    $region15: #{tpu_custom_call.1} parent=1 // pred_check_branch
      %41 = sbr.rel (0) target = $region17
    $region16: #{tpu_custom_call.1} parent=1 // pred_region
      %42 = dma.done [#allocation6], 2048
    $region17: #{tpu_custom_call.1} parent=1 // pred_fallthru
      _
    %v43 = vld [vmem:[#allocation2] sm:$0xff]
    %v44 = vld [vmem:[#allocation2 + $0x8] sm:$0xff]
    %v45 = vld [vmem:[#allocation2 + $0x10] sm:$0xff]
    %v46 = vld [vmem:[#allocation2 + $0x18] sm:$0xff]
    %v47 = vld [vmem:[#allocation2 + $0x20] sm:$0xff]
    %v48 = vld [vmem:[#allocation2 + $0x28] sm:$0xff]
    %v49 = vld [vmem:[#allocation2 + $0x30] sm:$0xff]
    %v50 = vld [vmem:[#allocation2 + $0x38] sm:$0xff]
    %v51 = vld [vmem:[#allocation2 + $0x40] sm:$0xff]
    %v52 = vld [vmem:[#allocation2 + $0x48] sm:$0xff]
    %v53 = vld [vmem:[#allocation2 + $0x50] sm:$0xff]
    %v54 = vld [vmem:[#allocation2 + $0x58] sm:$0xff]
    %v55 = vld [vmem:[#allocation2 + $0x60] sm:$0xff]
    %v56 = vld [vmem:[#allocation2 + $0x68] sm:$0xff]
    %v57 = vld [vmem:[#allocation2 + $0x70] sm:$0xff]
    %v58 = vld [vmem:[#allocation2 + $0x78] sm:$0xff]
    %v59 = vld [vmem:[#allocation5] sm:$0xff]
    %v60 = vld [vmem:[#allocation5 + $0x8] sm:$0xff]
    %v61 = vld [vmem:[#allocation5 + $0x10] sm:$0xff]
    %v62 = vld [vmem:[#allocation5 + $0x18] sm:$0xff]
    %v63 = vld [vmem:[#allocation5 + $0x20] sm:$0xff]
    %v64 = vld [vmem:[#allocation5 + $0x28] sm:$0xff]
    %v65 = vld [vmem:[#allocation5 + $0x30] sm:$0xff]
    %v66 = vld [vmem:[#allocation5 + $0x38] sm:$0xff]
    %v67 = vld [vmem:[#allocation5 + $0x40] sm:$0xff]
    %v68 = vld [vmem:[#allocation5 + $0x48] sm:$0xff]
    %v69 = vld [vmem:[#allocation5 + $0x50] sm:$0xff]
    %v70 = vld [vmem:[#allocation5 + $0x58] sm:$0xff]
    %v71 = vld [vmem:[#allocation5 + $0x60] sm:$0xff]
    %v72 = vld [vmem:[#allocation5 + $0x68] sm:$0xff]
    %v73 = vld [vmem:[#allocation5 + $0x70] sm:$0xff]
    %v74 = vld [vmem:[#allocation5 + $0x78] sm:$0xff]
    %75 = vadd.xlane.f32.xlu0 %v43
    %v76 = vpop.xlane.xlu0 %75
    %77 = vadd.xlane.f32.xlu0 %v44
    %v78 = vpop.xlane.xlu0 %77
    %79 = vadd.xlane.f32.xlu0 %v45
    %v80 = vpop.xlane.xlu0 %79
    %81 = vadd.xlane.f32.xlu0 %v46
    %v82 = vpop.xlane.xlu0 %81
    %83 = vadd.xlane.f32.xlu0 %v47
    %v84 = vpop.xlane.xlu0 %83
    %85 = vadd.xlane.f32.xlu0 %v48
    %v86 = vpop.xlane.xlu0 %85
    %87 = vadd.xlane.f32.xlu0 %v49
    %v88 = vpop.xlane.xlu0 %87
    %89 = vadd.xlane.f32.xlu0 %v50
    %v90 = vpop.xlane.xlu0 %89
    %91 = vadd.xlane.f32.xlu0 %v51
    %v92 = vpop.xlane.xlu0 %91
    %93 = vadd.xlane.f32.xlu0 %v52
    %v94 = vpop.xlane.xlu0 %93
    %95 = vadd.xlane.f32.xlu0 %v53
    %v96 = vpop.xlane.xlu0 %95
    %97 = vadd.xlane.f32.xlu0 %v54
    %v98 = vpop.xlane.xlu0 %97
    %99 = vadd.xlane.f32.xlu0 %v55
    %v100 = vpop.xlane.xlu0 %99
    %101 = vadd.xlane.f32.xlu0 %v56
    %v102 = vpop.xlane.xlu0 %101
    %103 = vadd.xlane.f32.xlu0 %v57
    %v104 = vpop.xlane.xlu0 %103
    %105 = vadd.xlane.f32.xlu0 %v58
    %v106 = vpop.xlane.xlu0 %105
    %v107 = vadd.f32 %v76, %v78
    %v108 = vadd.f32 %v107, %v80
    %v109 = vadd.f32 %v108, %v82
    %v110 = vadd.f32 %v109, %v84
    %v111 = vadd.f32 %v110, %v86
    %v112 = vadd.f32 %v111, %v88
    %v113 = vadd.f32 %v112, %v90
    %v114 = vadd.f32 %v113, %v92
    %v115 = vadd.f32 %v114, %v94
    %v116 = vadd.f32 %v115, %v96
    %v117 = vadd.f32 %v116, %v98
    %v118 = vadd.f32 %v117, %v100
    %v119 = vadd.f32 %v118, %v102
    %v120 = vadd.f32 %v119, %v104
    %v121 = vadd.f32 %v120, %v106
    %v122 = vrot.slane %v121, 4
    %v123 = vadd.f32 %v121, %v122
    %v124 = vrot.slane %v123, 2
    %v125 = vadd.f32 %v123, %v124
    %v126 = vrot.slane %v125, 1
    %v127 = vadd.f32 %v125, %v126
    %v128 = vmul.f32 %v127, 6.1035156e-05
    %129 = vadd.xlane.f32.xlu0 %v59
    %v130 = vpop.xlane.xlu0 %129
    %131 = vadd.xlane.f32.xlu0 %v60
    %v132 = vpop.xlane.xlu0 %131
    %133 = vadd.xlane.f32.xlu0 %v61
    %v134 = vpop.xlane.xlu0 %133
    %135 = vadd.xlane.f32.xlu0 %v62
    %v136 = vpop.xlane.xlu0 %135
    %137 = vadd.xlane.f32.xlu0 %v63
    %v138 = vpop.xlane.xlu0 %137
    %139 = vadd.xlane.f32.xlu0 %v64
    %v140 = vpop.xlane.xlu0 %139
    %141 = vadd.xlane.f32.xlu0 %v65
    %v142 = vpop.xlane.xlu0 %141
    %143 = vadd.xlane.f32.xlu0 %v66
    %v144 = vpop.xlane.xlu0 %143
    %145 = vadd.xlane.f32.xlu0 %v67
    %v146 = vpop.xlane.xlu0 %145
    %147 = vadd.xlane.f32.xlu0 %v68
    %v148 = vpop.xlane.xlu0 %147
    %149 = vadd.xlane.f32.xlu0 %v69
    %v150 = vpop.xlane.xlu0 %149
    %151 = vadd.xlane.f32.xlu0 %v70
    %v152 = vpop.xlane.xlu0 %151
    %153 = vadd.xlane.f32.xlu0 %v71
    %v154 = vpop.xlane.xlu0 %153
    %155 = vadd.xlane.f32.xlu0 %v72
    %v156 = vpop.xlane.xlu0 %155
    %157 = vadd.xlane.f32.xlu0 %v73
    %v158 = vpop.xlane.xlu0 %157
    %159 = vadd.xlane.f32.xlu0 %v74
    %v160 = vpop.xlane.xlu0 %159
    %v161 = vadd.f32 %v130, %v132
    %v162 = vadd.f32 %v161, %v134
    %v163 = vadd.f32 %v162, %v136
    %v164 = vadd.f32 %v163, %v138
    %v165 = vadd.f32 %v164, %v140
    %v166 = vadd.f32 %v165, %v142
    %v167 = vadd.f32 %v166, %v144
    %v168 = vadd.f32 %v167, %v146
    %v169 = vadd.f32 %v168, %v148
    %v170 = vadd.f32 %v169, %v150
    %v171 = vadd.f32 %v170, %v152
    %v172 = vadd.f32 %v171, %v154
    %v173 = vadd.f32 %v172, %v156
    %v174 = vadd.f32 %v173, %v158
    %v175 = vadd.f32 %v174, %v160
    %v176 = vrot.slane %v175, 4
    %v177 = vadd.f32 %v175, %v176
    %v178 = vrot.slane %v177, 2
    %v179 = vadd.f32 %v177, %v178
    %v180 = vrot.slane %v179, 1
    %v181 = vadd.f32 %v179, %v180
    %v182 = vmul.f32 %v181, 6.1035156e-05
    %v183 = vsub.f32 %v182, %v43
    %v184 = vsub.f32 %v182, %v44
    %v185 = vsub.f32 %v182, %v45
    %v186 = vsub.f32 %v182, %v46
    %v187 = vsub.f32 %v182, %v47
    %v188 = vsub.f32 %v182, %v48
    %v189 = vsub.f32 %v182, %v49
    %v190 = vsub.f32 %v182, %v50
    %v191 = vsub.f32 %v182, %v51
    %v192 = vsub.f32 %v182, %v52
    %v193 = vsub.f32 %v182, %v53
    %v194 = vsub.f32 %v182, %v54
    %v195 = vsub.f32 %v182, %v55
    %v196 = vsub.f32 %v182, %v56
    %v197 = vsub.f32 %v182, %v57
    %v198 = vsub.f32 %v182, %v58
    %v199 = vmax.f32 %v183, 0.0
    %v200 = vmax.f32 %v184, 0.0
    %v201 = vmax.f32 %v185, 0.0
    %v202 = vmax.f32 %v186, 0.0
    %v203 = vmax.f32 %v187, 0.0
    %v204 = vmax.f32 %v188, 0.0
    %v205 = vmax.f32 %v189, 0.0
    %v206 = vmax.f32 %v190, 0.0
    %v207 = vmax.f32 %v191, 0.0
    %v208 = vmax.f32 %v192, 0.0
    %v209 = vmax.f32 %v193, 0.0
    %v210 = vmax.f32 %v194, 0.0
    %v211 = vmax.f32 %v195, 0.0
    %v212 = vmax.f32 %v196, 0.0
    %v213 = vmax.f32 %v197, 0.0
    %v214 = vmax.f32 %v198, 0.0
    %v215 = vand.u32 2147483647, %v183
    %v216 = vand.u32 2147483647, %v184
    %v217 = vand.u32 2147483647, %v185
    %v218 = vand.u32 2147483647, %v186
    %v219 = vand.u32 2147483647, %v187
    %v220 = vand.u32 2147483647, %v188
    %v221 = vand.u32 2147483647, %v189
    %v222 = vand.u32 2147483647, %v190
    %v223 = vand.u32 2147483647, %v191
    %v224 = vand.u32 2147483647, %v192
    %v225 = vand.u32 2147483647, %v193
    %v226 = vand.u32 2147483647, %v194
    %v227 = vand.u32 2147483647, %v195
    %v228 = vand.u32 2147483647, %v196
    %v229 = vand.u32 2147483647, %v197
    %v230 = vand.u32 2147483647, %v198
    %v231 = vsub.f32 0.0, %v215
    %v232 = vsub.f32 0.0, %v216
    %v233 = vsub.f32 0.0, %v217
    %v234 = vsub.f32 0.0, %v218
    %v235 = vsub.f32 0.0, %v219
    %v236 = vsub.f32 0.0, %v220
    %v237 = vsub.f32 0.0, %v221
    %v238 = vsub.f32 0.0, %v222
    %v239 = vsub.f32 0.0, %v223
    %v240 = vsub.f32 0.0, %v224
    %v241 = vsub.f32 0.0, %v225
    %v242 = vsub.f32 0.0, %v226
    %v243 = vsub.f32 0.0, %v227
    %v244 = vsub.f32 0.0, %v228
    %v245 = vsub.f32 0.0, %v229
    %v246 = vsub.f32 0.0, %v230
    %v247 = vmul.f32 %v231, 1.442695
    %v248 = vpow.pop %v247
    %v249 = vmul.f32 %v232, 1.442695
    %v250 = vpow.pop %v249
    %v251 = vmul.f32 %v233, 1.442695
    %v252 = vpow.pop %v251
    %v253 = vmul.f32 %v234, 1.442695
    %v254 = vpow.pop %v253
    %v255 = vmul.f32 %v235, 1.442695
    %v256 = vpow.pop %v255
    %v257 = vmul.f32 %v236, 1.442695
    %v258 = vpow.pop %v257
    %v259 = vmul.f32 %v237, 1.442695
    %v260 = vpow.pop %v259
    %v261 = vmul.f32 %v238, 1.442695
    %v262 = vpow.pop %v261
    %v263 = vmul.f32 %v239, 1.442695
    %v264 = vpow.pop %v263
    %v265 = vmul.f32 %v240, 1.442695
    %v266 = vpow.pop %v265
    %v267 = vmul.f32 %v241, 1.442695
    %v268 = vpow.pop %v267
    %v269 = vmul.f32 %v242, 1.442695
    %v270 = vpow.pop %v269
    %v271 = vmul.f32 %v243, 1.442695
    %v272 = vpow.pop %v271
    %v273 = vmul.f32 %v244, 1.442695
    %v274 = vpow.pop %v273
    %v275 = vmul.f32 %v245, 1.442695
    %v276 = vpow.pop %v275
    %v277 = vmul.f32 %v246, 1.442695
    %v278 = vpow.pop %v277
    %v279 = vadd.f32 %v248, 1.0
    %v280 = vlog2.pop %v279
    %v281 = vmul.f32 %v280, 0.6931472
    %v282 = vmul.f32 -0.5, %v248
    %v283 = vadd.f32 %v282, 1.0
    %v284 = vmul.f32 %v283, %v248
    %v285 = vand.u32 2147483647, %v248
    %vm286 = vcmp.lt.f32.partialorder %v285, 0.0004427343
    %v287 = vsel %vm286, %v284, %v281
    %v288 = vadd.f32 %v250, 1.0
    %v289 = vlog2.pop %v288
    %v290 = vmul.f32 %v289, 0.6931472
    %v291 = vmul.f32 -0.5, %v250
    %v292 = vadd.f32 %v291, 1.0
    %v293 = vmul.f32 %v292, %v250
    %v294 = vand.u32 2147483647, %v250
    %vm295 = vcmp.lt.f32.partialorder %v294, 0.0004427343
    %v296 = vsel %vm295, %v293, %v290
    %v297 = vadd.f32 %v252, 1.0
    %v298 = vlog2.pop %v297
    %v299 = vmul.f32 %v298, 0.6931472
    %v300 = vmul.f32 -0.5, %v252
    %v301 = vadd.f32 %v300, 1.0
    %v302 = vmul.f32 %v301, %v252
    %v303 = vand.u32 2147483647, %v252
    %vm304 = vcmp.lt.f32.partialorder %v303, 0.0004427343
    %v305 = vsel %vm304, %v302, %v299
    %v306 = vadd.f32 %v254, 1.0
    %v307 = vlog2.pop %v306
    %v308 = vmul.f32 %v307, 0.6931472
    %v309 = vmul.f32 -0.5, %v254
    %v310 = vadd.f32 %v309, 1.0
    %v311 = vmul.f32 %v310, %v254
    %v312 = vand.u32 2147483647, %v254
    %vm313 = vcmp.lt.f32.partialorder %v312, 0.0004427343
    %v314 = vsel %vm313, %v311, %v308
    %v315 = vadd.f32 %v256, 1.0
    %v316 = vlog2.pop %v315
    %v317 = vmul.f32 %v316, 0.6931472
    %v318 = vmul.f32 -0.5, %v256
    %v319 = vadd.f32 %v318, 1.0
    %v320 = vmul.f32 %v319, %v256
    %v321 = vand.u32 2147483647, %v256
    %vm322 = vcmp.lt.f32.partialorder %v321, 0.0004427343
    %v323 = vsel %vm322, %v320, %v317
    %v324 = vadd.f32 %v258, 1.0
    %v325 = vlog2.pop %v324
    %v326 = vmul.f32 %v325, 0.6931472
    %v327 = vmul.f32 -0.5, %v258
    %v328 = vadd.f32 %v327, 1.0
    %v329 = vmul.f32 %v328, %v258
    %v330 = vand.u32 2147483647, %v258
    %vm331 = vcmp.lt.f32.partialorder %v330, 0.0004427343
    %v332 = vsel %vm331, %v329, %v326
    %v333 = vadd.f32 %v260, 1.0
    %v334 = vlog2.pop %v333
    %v335 = vmul.f32 %v334, 0.6931472
    %v336 = vmul.f32 -0.5, %v260
    %v337 = vadd.f32 %v336, 1.0
    %v338 = vmul.f32 %v337, %v260
    %v339 = vand.u32 2147483647, %v260
    %vm340 = vcmp.lt.f32.partialorder %v339, 0.0004427343
    %v341 = vsel %vm340, %v338, %v335
    %v342 = vadd.f32 %v262, 1.0
    %v343 = vlog2.pop %v342
    %v344 = vmul.f32 %v343, 0.6931472
    %v345 = vmul.f32 -0.5, %v262
    %v346 = vadd.f32 %v345, 1.0
    %v347 = vmul.f32 %v346, %v262
    %v348 = vand.u32 2147483647, %v262
    %vm349 = vcmp.lt.f32.partialorder %v348, 0.0004427343
    %v350 = vsel %vm349, %v347, %v344
    %v351 = vadd.f32 %v264, 1.0
    %v352 = vlog2.pop %v351
    %v353 = vmul.f32 %v352, 0.6931472
    %v354 = vmul.f32 -0.5, %v264
    %v355 = vadd.f32 %v354, 1.0
    %v356 = vmul.f32 %v355, %v264
    %v357 = vand.u32 2147483647, %v264
    %vm358 = vcmp.lt.f32.partialorder %v357, 0.0004427343
    %v359 = vsel %vm358, %v356, %v353
    %v360 = vadd.f32 %v266, 1.0
    %v361 = vlog2.pop %v360
    %v362 = vmul.f32 %v361, 0.6931472
    %v363 = vmul.f32 -0.5, %v266
    %v364 = vadd.f32 %v363, 1.0
    %v365 = vmul.f32 %v364, %v266
    %v366 = vand.u32 2147483647, %v266
    %vm367 = vcmp.lt.f32.partialorder %v366, 0.0004427343
    %v368 = vsel %vm367, %v365, %v362
    %v369 = vadd.f32 %v268, 1.0
    %v370 = vlog2.pop %v369
    %v371 = vmul.f32 %v370, 0.6931472
    %v372 = vmul.f32 -0.5, %v268
    %v373 = vadd.f32 %v372, 1.0
    %v374 = vmul.f32 %v373, %v268
    %v375 = vand.u32 2147483647, %v268
    %vm376 = vcmp.lt.f32.partialorder %v375, 0.0004427343
    %v377 = vsel %vm376, %v374, %v371
    %v378 = vadd.f32 %v270, 1.0
    %v379 = vlog2.pop %v378
    %v380 = vmul.f32 %v379, 0.6931472
    %v381 = vmul.f32 -0.5, %v270
    %v382 = vadd.f32 %v381, 1.0
    %v383 = vmul.f32 %v382, %v270
    %v384 = vand.u32 2147483647, %v270
    %vm385 = vcmp.lt.f32.partialorder %v384, 0.0004427343
    %v386 = vsel %vm385, %v383, %v380
    %v387 = vadd.f32 %v272, 1.0
    %v388 = vlog2.pop %v387
    %v389 = vmul.f32 %v388, 0.6931472
    %v390 = vmul.f32 -0.5, %v272
    %v391 = vadd.f32 %v390, 1.0
    %v392 = vmul.f32 %v391, %v272
    %v393 = vand.u32 2147483647, %v272
    %vm394 = vcmp.lt.f32.partialorder %v393, 0.0004427343
    %v395 = vsel %vm394, %v392, %v389
    %v396 = vadd.f32 %v274, 1.0
    %v397 = vlog2.pop %v396
    %v398 = vmul.f32 %v397, 0.6931472
    %v399 = vmul.f32 -0.5, %v274
    %v400 = vadd.f32 %v399, 1.0
    %v401 = vmul.f32 %v400, %v274
    %v402 = vand.u32 2147483647, %v274
    %vm403 = vcmp.lt.f32.partialorder %v402, 0.0004427343
    %v404 = vsel %vm403, %v401, %v398
    %v405 = vadd.f32 %v276, 1.0
    %v406 = vlog2.pop %v405
    %v407 = vmul.f32 %v406, 0.6931472
    %v408 = vmul.f32 -0.5, %v276
    %v409 = vadd.f32 %v408, 1.0
    %v410 = vmul.f32 %v409, %v276
    %v411 = vand.u32 2147483647, %v276
    %vm412 = vcmp.lt.f32.partialorder %v411, 0.0004427343
    %v413 = vsel %vm412, %v410, %v407
    %v414 = vadd.f32 %v278, 1.0
    %v415 = vlog2.pop %v414
    %v416 = vmul.f32 %v415, 0.6931472
    %v417 = vmul.f32 -0.5, %v278
    %v418 = vadd.f32 %v417, 1.0
    %v419 = vmul.f32 %v418, %v278
    %v420 = vand.u32 2147483647, %v278
    %vm421 = vcmp.lt.f32.partialorder %v420, 0.0004427343
    %v422 = vsel %vm421, %v419, %v416
    %v423 = vadd.f32 %v199, %v287
    %v424 = vadd.f32 %v200, %v296
    %v425 = vadd.f32 %v201, %v305
    %v426 = vadd.f32 %v202, %v314
    %v427 = vadd.f32 %v203, %v323
    %v428 = vadd.f32 %v204, %v332
    %v429 = vadd.f32 %v205, %v341
    %v430 = vadd.f32 %v206, %v350
    %v431 = vadd.f32 %v207, %v359
    %v432 = vadd.f32 %v208, %v368
    %v433 = vadd.f32 %v209, %v377
    %v434 = vadd.f32 %v210, %v386
    %v435 = vadd.f32 %v211, %v395
    %v436 = vadd.f32 %v212, %v404
    %v437 = vadd.f32 %v213, %v413
    %v438 = vadd.f32 %v214, %v422
    %v439 = vsub.f32 %v59, %v128
    %v440 = vsub.f32 %v60, %v128
    %v441 = vsub.f32 %v61, %v128
    %v442 = vsub.f32 %v62, %v128
    %v443 = vsub.f32 %v63, %v128
    %v444 = vsub.f32 %v64, %v128
    %v445 = vsub.f32 %v65, %v128
    %v446 = vsub.f32 %v66, %v128
    %v447 = vsub.f32 %v67, %v128
    %v448 = vsub.f32 %v68, %v128
    %v449 = vsub.f32 %v69, %v128
    %v450 = vsub.f32 %v70, %v128
    %v451 = vsub.f32 %v71, %v128
    %v452 = vsub.f32 %v72, %v128
    %v453 = vsub.f32 %v73, %v128
    %v454 = vsub.f32 %v74, %v128
    %v455 = vmax.f32 %v439, 0.0
    %v456 = vmax.f32 %v440, 0.0
    %v457 = vmax.f32 %v441, 0.0
    %v458 = vmax.f32 %v442, 0.0
    %v459 = vmax.f32 %v443, 0.0
    %v460 = vmax.f32 %v444, 0.0
    %v461 = vmax.f32 %v445, 0.0
    %v462 = vmax.f32 %v446, 0.0
    %v463 = vmax.f32 %v447, 0.0
    %v464 = vmax.f32 %v448, 0.0
    %v465 = vmax.f32 %v449, 0.0
    %v466 = vmax.f32 %v450, 0.0
    %v467 = vmax.f32 %v451, 0.0
    %v468 = vmax.f32 %v452, 0.0
    %v469 = vmax.f32 %v453, 0.0
    %v470 = vmax.f32 %v454, 0.0
    %v471 = vand.u32 2147483647, %v439
    %v472 = vand.u32 2147483647, %v440
    %v473 = vand.u32 2147483647, %v441
    %v474 = vand.u32 2147483647, %v442
    %v475 = vand.u32 2147483647, %v443
    %v476 = vand.u32 2147483647, %v444
    %v477 = vand.u32 2147483647, %v445
    %v478 = vand.u32 2147483647, %v446
    %v479 = vand.u32 2147483647, %v447
    %v480 = vand.u32 2147483647, %v448
    %v481 = vand.u32 2147483647, %v449
    %v482 = vand.u32 2147483647, %v450
    %v483 = vand.u32 2147483647, %v451
    %v484 = vand.u32 2147483647, %v452
    %v485 = vand.u32 2147483647, %v453
    %v486 = vand.u32 2147483647, %v454
    %v487 = vsub.f32 0.0, %v471
    %v488 = vsub.f32 0.0, %v472
    %v489 = vsub.f32 0.0, %v473
    %v490 = vsub.f32 0.0, %v474
    %v491 = vsub.f32 0.0, %v475
    %v492 = vsub.f32 0.0, %v476
    %v493 = vsub.f32 0.0, %v477
    %v494 = vsub.f32 0.0, %v478
    %v495 = vsub.f32 0.0, %v479
    %v496 = vsub.f32 0.0, %v480
    %v497 = vsub.f32 0.0, %v481
    %v498 = vsub.f32 0.0, %v482
    %v499 = vsub.f32 0.0, %v483
    %v500 = vsub.f32 0.0, %v484
    %v501 = vsub.f32 0.0, %v485
    %v502 = vsub.f32 0.0, %v486
    %v503 = vmul.f32 %v487, 1.442695
    %v504 = vpow.pop %v503
    %v505 = vmul.f32 %v488, 1.442695
    %v506 = vpow.pop %v505
    %v507 = vmul.f32 %v489, 1.442695
    %v508 = vpow.pop %v507
    %v509 = vmul.f32 %v490, 1.442695
    %v510 = vpow.pop %v509
    %v511 = vmul.f32 %v491, 1.442695
    %v512 = vpow.pop %v511
    %v513 = vmul.f32 %v492, 1.442695
    %v514 = vpow.pop %v513
    %v515 = vmul.f32 %v493, 1.442695
    %v516 = vpow.pop %v515
    %v517 = vmul.f32 %v494, 1.442695
    %v518 = vpow.pop %v517
    %v519 = vmul.f32 %v495, 1.442695
    %v520 = vpow.pop %v519
    %v521 = vmul.f32 %v496, 1.442695
    %v522 = vpow.pop %v521
    %v523 = vmul.f32 %v497, 1.442695
    %v524 = vpow.pop %v523
    %v525 = vmul.f32 %v498, 1.442695
    %v526 = vpow.pop %v525
    %v527 = vmul.f32 %v499, 1.442695
    %v528 = vpow.pop %v527
    %v529 = vmul.f32 %v500, 1.442695
    %v530 = vpow.pop %v529
    %v531 = vmul.f32 %v501, 1.442695
    %v532 = vpow.pop %v531
    %v533 = vmul.f32 %v502, 1.442695
    %v534 = vpow.pop %v533
    %v535 = vadd.f32 %v504, 1.0
    %v536 = vlog2.pop %v535
    %v537 = vmul.f32 %v536, 0.6931472
    %v538 = vmul.f32 -0.5, %v504
    %v539 = vadd.f32 %v538, 1.0
    %v540 = vmul.f32 %v539, %v504
    %v541 = vand.u32 2147483647, %v504
    %vm542 = vcmp.lt.f32.partialorder %v541, 0.0004427343
    %v543 = vsel %vm542, %v540, %v537
    %v544 = vadd.f32 %v506, 1.0
    %v545 = vlog2.pop %v544
    %v546 = vmul.f32 %v545, 0.6931472
    %v547 = vmul.f32 -0.5, %v506
    %v548 = vadd.f32 %v547, 1.0
    %v549 = vmul.f32 %v548, %v506
    %v550 = vand.u32 2147483647, %v506
    %vm551 = vcmp.lt.f32.partialorder %v550, 0.0004427343
    %v552 = vsel %vm551, %v549, %v546
    %v553 = vadd.f32 %v508, 1.0
    %v554 = vlog2.pop %v553
    %v555 = vmul.f32 %v554, 0.6931472
    %v556 = vmul.f32 -0.5, %v508
    %v557 = vadd.f32 %v556, 1.0
    %v558 = vmul.f32 %v557, %v508
    %v559 = vand.u32 2147483647, %v508
    %vm560 = vcmp.lt.f32.partialorder %v559, 0.0004427343
    %v561 = vsel %vm560, %v558, %v555
    %v562 = vadd.f32 %v510, 1.0
    %v563 = vlog2.pop %v562
    %v564 = vmul.f32 %v563, 0.6931472
    %v565 = vmul.f32 -0.5, %v510
    %v566 = vadd.f32 %v565, 1.0
    %v567 = vmul.f32 %v566, %v510
    %v568 = vand.u32 2147483647, %v510
    %vm569 = vcmp.lt.f32.partialorder %v568, 0.0004427343
    %v570 = vsel %vm569, %v567, %v564
    %v571 = vadd.f32 %v512, 1.0
    %v572 = vlog2.pop %v571
    %v573 = vmul.f32 %v572, 0.6931472
    %v574 = vmul.f32 -0.5, %v512
    %v575 = vadd.f32 %v574, 1.0
    %v576 = vmul.f32 %v575, %v512
    %v577 = vand.u32 2147483647, %v512
    %vm578 = vcmp.lt.f32.partialorder %v577, 0.0004427343
    %v579 = vsel %vm578, %v576, %v573
    %v580 = vadd.f32 %v514, 1.0
    %v581 = vlog2.pop %v580
    %v582 = vmul.f32 %v581, 0.6931472
    %v583 = vmul.f32 -0.5, %v514
    %v584 = vadd.f32 %v583, 1.0
    %v585 = vmul.f32 %v584, %v514
    %v586 = vand.u32 2147483647, %v514
    %vm587 = vcmp.lt.f32.partialorder %v586, 0.0004427343
    %v588 = vsel %vm587, %v585, %v582
    %v589 = vadd.f32 %v516, 1.0
    %v590 = vlog2.pop %v589
    %v591 = vmul.f32 %v590, 0.6931472
    %v592 = vmul.f32 -0.5, %v516
    %v593 = vadd.f32 %v592, 1.0
    %v594 = vmul.f32 %v593, %v516
    %v595 = vand.u32 2147483647, %v516
    %vm596 = vcmp.lt.f32.partialorder %v595, 0.0004427343
    %v597 = vsel %vm596, %v594, %v591
    %v598 = vadd.f32 %v518, 1.0
    %v599 = vlog2.pop %v598
    %v600 = vmul.f32 %v599, 0.6931472
    %v601 = vmul.f32 -0.5, %v518
    %v602 = vadd.f32 %v601, 1.0
    %v603 = vmul.f32 %v602, %v518
    %v604 = vand.u32 2147483647, %v518
    %vm605 = vcmp.lt.f32.partialorder %v604, 0.0004427343
    %v606 = vsel %vm605, %v603, %v600
    %v607 = vadd.f32 %v520, 1.0
    %v608 = vlog2.pop %v607
    %v609 = vmul.f32 %v608, 0.6931472
    %v610 = vmul.f32 -0.5, %v520
    %v611 = vadd.f32 %v610, 1.0
    %v612 = vmul.f32 %v611, %v520
    %v613 = vand.u32 2147483647, %v520
    %vm614 = vcmp.lt.f32.partialorder %v613, 0.0004427343
    %v615 = vsel %vm614, %v612, %v609
    %v616 = vadd.f32 %v522, 1.0
    %v617 = vlog2.pop %v616
    %v618 = vmul.f32 %v617, 0.6931472
    %v619 = vmul.f32 -0.5, %v522
    %v620 = vadd.f32 %v619, 1.0
    %v621 = vmul.f32 %v620, %v522
    %v622 = vand.u32 2147483647, %v522
    %vm623 = vcmp.lt.f32.partialorder %v622, 0.0004427343
    %v624 = vsel %vm623, %v621, %v618
    %v625 = vadd.f32 %v524, 1.0
    %v626 = vlog2.pop %v625
    %v627 = vmul.f32 %v626, 0.6931472
    %v628 = vmul.f32 -0.5, %v524
    %v629 = vadd.f32 %v628, 1.0
    %v630 = vmul.f32 %v629, %v524
    %v631 = vand.u32 2147483647, %v524
    %vm632 = vcmp.lt.f32.partialorder %v631, 0.0004427343
    %v633 = vsel %vm632, %v630, %v627
    %v634 = vadd.f32 %v526, 1.0
    %v635 = vlog2.pop %v634
    %v636 = vmul.f32 %v635, 0.6931472
    %v637 = vmul.f32 -0.5, %v526
    %v638 = vadd.f32 %v637, 1.0
    %v639 = vmul.f32 %v638, %v526
    %v640 = vand.u32 2147483647, %v526
    %vm641 = vcmp.lt.f32.partialorder %v640, 0.0004427343
    %v642 = vsel %vm641, %v639, %v636
    %v643 = vadd.f32 %v528, 1.0
    %v644 = vlog2.pop %v643
    %v645 = vmul.f32 %v644, 0.6931472
    %v646 = vmul.f32 -0.5, %v528
    %v647 = vadd.f32 %v646, 1.0
    %v648 = vmul.f32 %v647, %v528
    %v649 = vand.u32 2147483647, %v528
    %vm650 = vcmp.lt.f32.partialorder %v649, 0.0004427343
    %v651 = vsel %vm650, %v648, %v645
    %v652 = vadd.f32 %v530, 1.0
    %v653 = vlog2.pop %v652
    %v654 = vmul.f32 %v653, 0.6931472
    %v655 = vmul.f32 -0.5, %v530
    %v656 = vadd.f32 %v655, 1.0
    %v657 = vmul.f32 %v656, %v530
    %v658 = vand.u32 2147483647, %v530
    %vm659 = vcmp.lt.f32.partialorder %v658, 0.0004427343
    %v660 = vsel %vm659, %v657, %v654
    %v661 = vadd.f32 %v532, 1.0
    %v662 = vlog2.pop %v661
    %v663 = vmul.f32 %v662, 0.6931472
    %v664 = vmul.f32 -0.5, %v532
    %v665 = vadd.f32 %v664, 1.0
    %v666 = vmul.f32 %v665, %v532
    %v667 = vand.u32 2147483647, %v532
    %vm668 = vcmp.lt.f32.partialorder %v667, 0.0004427343
    %v669 = vsel %vm668, %v666, %v663
    %v670 = vadd.f32 %v534, 1.0
    %v671 = vlog2.pop %v670
    %v672 = vmul.f32 %v671, 0.6931472
    %v673 = vmul.f32 -0.5, %v534
    %v674 = vadd.f32 %v673, 1.0
    %v675 = vmul.f32 %v674, %v534
    %v676 = vand.u32 2147483647, %v534
    %vm677 = vcmp.lt.f32.partialorder %v676, 0.0004427343
    %v678 = vsel %vm677, %v675, %v672
    %v679 = vadd.f32 %v455, %v543
    %v680 = vadd.f32 %v456, %v552
    %v681 = vadd.f32 %v457, %v561
    %v682 = vadd.f32 %v458, %v570
    %v683 = vadd.f32 %v459, %v579
    %v684 = vadd.f32 %v460, %v588
    %v685 = vadd.f32 %v461, %v597
    %v686 = vadd.f32 %v462, %v606
    %v687 = vadd.f32 %v463, %v615
    %v688 = vadd.f32 %v464, %v624
    %v689 = vadd.f32 %v465, %v633
    %v690 = vadd.f32 %v466, %v642
    %v691 = vadd.f32 %v467, %v651
    %v692 = vadd.f32 %v468, %v660
    %v693 = vadd.f32 %v469, %v669
    %v694 = vadd.f32 %v470, %v678
    %v695 = vadd.f32 %v423, %v424
    %v696 = vadd.f32 %v695, %v425
    %v697 = vadd.f32 %v696, %v426
    %v698 = vadd.f32 %v697, %v427
    %v699 = vadd.f32 %v698, %v428
    %v700 = vadd.f32 %v699, %v429
    %v701 = vadd.f32 %v700, %v430
    %v702 = vadd.f32 %v701, %v431
    %v703 = vadd.f32 %v702, %v432
    %v704 = vadd.f32 %v703, %v433
    %v705 = vadd.f32 %v704, %v434
    %v706 = vadd.f32 %v705, %v435
    %v707 = vadd.f32 %v706, %v436
    %v708 = vadd.f32 %v707, %v437
    %v709 = vadd.f32 %v708, %v438
    %v710 = vrot.slane %v709, 4
    %v711 = vadd.f32 %v709, %v710
    %v712 = vrot.slane %v711, 2
    %v713 = vadd.f32 %v711, %v712
    %v714 = vrot.slane %v713, 1
    %v715 = vadd.f32 %v713, %v714
    %716 = vst [vmem:[#allocation7] sm:$0x1] %v715
    %v717 = vadd.f32 %v679, %v680
    %v718 = vadd.f32 %v717, %v681
    %v719 = vadd.f32 %v718, %v682
    %v720 = vadd.f32 %v719, %v683
    %v721 = vadd.f32 %v720, %v684
    %v722 = vadd.f32 %v721, %v685
    %v723 = vadd.f32 %v722, %v686
    %v724 = vadd.f32 %v723, %v687
    %v725 = vadd.f32 %v724, %v688
    %v726 = vadd.f32 %v725, %v689
    %v727 = vadd.f32 %v726, %v690
    %v728 = vadd.f32 %v727, %v691
    %v729 = vadd.f32 %v728, %v692
    %v730 = vadd.f32 %v729, %v693
    %v731 = vadd.f32 %v730, %v694
    %v732 = vrot.slane %v731, 4
    %v733 = vadd.f32 %v731, %v732
    %v734 = vrot.slane %v733, 2
    %v735 = vadd.f32 %v733, %v734
    %v736 = vrot.slane %v735, 1
    %v737 = vadd.f32 %v735, %v736
    %738 = vst [vmem:[#allocation8] sm:$0x1] %v737
    // Predicated region
    $region18: #{tpu_custom_call.1} parent=1 // pred_check
      _
    $region19: #{tpu_custom_call.1} parent=1 // pred_check_branch
      %740 = sbr.rel (0) target = $region21
    $region20: #{tpu_custom_call.1} parent=1 // pred_region
      %s742 = ssub.s32 16, 16
      %743 = vsyncadd [#allocation4], %s742
      %s745 = sshll.u32 [#allocation7], 4
      %s746 = int_to_ptr.vmem [resolvable:$true] %s745
      %748 = dma.vmem_to_hbm [thread:$0]  %s746, 16, %s2, [#allocation4]
    $region21: #{tpu_custom_call.1} parent=1 // pred_fallthru
      _
    // Predicated region
    $region22: #{tpu_custom_call.1} parent=1 // pred_check
      _
    $region23: #{tpu_custom_call.1} parent=1 // pred_check_branch
      %750 = sbr.rel (0) target = $region25
    $region24: #{tpu_custom_call.1} parent=1 // pred_region
      %s752 = ssub.s32 16, 16
      %753 = vsyncadd [#allocation9], %s752
      %s755 = sshll.u32 [#allocation8], 4
      %s756 = int_to_ptr.vmem [resolvable:$true] %s755
      %758 = dma.vmem_to_hbm [thread:$0]  %s756, 16, %s3, [#allocation9]
    $region25: #{tpu_custom_call.1} parent=1 // pred_fallthru
      _
    // Predicated region
    $region26: #{tpu_custom_call.1} parent=1 // pred_check
      _
    $region27: #{tpu_custom_call.1} parent=1 // pred_check_branch
      %760 = sbr.rel (0) target = $region29
    $region28: #{tpu_custom_call.1} parent=1 // pred_region
      %761 = dma.done [#allocation4], 16
    $region29: #{tpu_custom_call.1} parent=1 // pred_fallthru
      _
    // Predicated region
    $region30: #{tpu_custom_call.1} parent=1 // pred_check
      _
    $region31: #{tpu_custom_call.1} parent=1 // pred_check_branch
      %763 = sbr.rel (0) target = $region33
    $region32: #{tpu_custom_call.1} parent=1 // pred_region
      %764 = dma.done [#allocation9], 16
    $region33: #{tpu_custom_call.1} parent=1 // pred_fallthru
      _
    %765 = vsyncpa [#allocation3], 1
    %766 = vsyncpa [#allocation6], 1
    %767 = vsyncpa [#allocation4], 1
    %768 = vsyncpa [#allocation9], 1

</llo_original>
